<compile_context>
chip_gen: v6e
topology: v6e:2x2x1
jax: 0.10.0
libtpu: 0.0.40
codegen_flags: <defaults>
</compile_context>

<pallas_src>
import jax
import jax.numpy as jnp
from jax.experimental import pallas as pl
from jax.experimental.pallas import tpu as pltpu


# ---------------------------------------------------------------------------
# Path A: small vocab -- VMEM-resident table, TS tokens per grid step.
# ---------------------------------------------------------------------------
def _make_table_gather_kernel(ts, vocab):
    def kernel(ids_ref, table_ref, out_ref):
        # ids_ref:   SMEM (S_pad,) int32 scalar-prefetched token ids
        # table_ref: VMEM (V, H) embedding table (constant block index ->
        #            fetched from HBM only once for the whole grid)
        # out_ref:   VMEM (ts, H) output tile (sublane/lane dense)
        base = pl.program_id(0) * ts
        for i in range(ts):  # static unroll; ts is small (8 for f32)
            # OOB clamp on the scalar path (rides otherwise-idle scalar ALU).
            tok = jnp.minimum(jnp.maximum(ids_ref[base + i], 0), vocab - 1)
            out_ref[pl.ds(i, 1), :] = table_ref[pl.ds(tok, 1), :]
    return kernel


def _embed_rows_table_resident(ids, table, ts):
    V, H = table.shape
    S = ids.shape[0]
    n_blocks = pl.cdiv(S, ts)
    S_pad = n_blocks * ts
    if S_pad != S:
        ids = jnp.pad(ids, (0, S_pad - S))  # pad with id 0; rows sliced off below

    out = pl.pallas_call(
        _make_table_gather_kernel(ts, V),
        out_shape=jax.ShapeDtypeStruct((S_pad, H), table.dtype),
        grid_spec=pltpu.PrefetchScalarGridSpec(
            num_scalar_prefetch=1,
            grid=(n_blocks,),
            # Block index never changes -> table stays VMEM-resident.
            in_specs=[pl.BlockSpec((V, H), lambda s, ids_ref: (0, 0))],
            out_specs=pl.BlockSpec((ts, H), lambda s, ids_ref: (s, 0)),
        ),
        compiler_params=pltpu.CompilerParams(
            # Disjoint output rows per step -> legal; shards across v7x's 2 TCs.
            dimension_semantics=("parallel",),
        ),
    )(ids, table)
    return out[:S] if S_pad != S else out


# ---------------------------------------------------------------------------
# Path B: large vocab -- per-row HBM gather via the index_map (table in HBM).
# ---------------------------------------------------------------------------
def _copy_row_kernel(ids_ref, row_ref, out_ref):
    # row_ref: VMEM (1, H) -- the embedding row already gathered by BlockSpec
    del ids_ref
    out_ref[...] = row_ref[...]


def _embed_rows_hbm_gather(ids, table):
    V, H = table.shape
    S = ids.shape[0]

    def row_index_map(s, ids_ref):
        # OOB clamp folded into the index_map (no extra XLA pass over ids).
        return (jnp.minimum(jnp.maximum(ids_ref[s], 0), V - 1), 0)

    # Each gather moves only ~H*itemsize bytes and is DMA-latency bound, so a
    # deeper pipeline keeps more row DMAs in flight.  Fall back to default
    # double-buffering if this jax build lacks pipeline_mode / Buffered.
    try:
        in_spec = pl.BlockSpec((1, H), row_index_map,
                               pipeline_mode=pl.Buffered(4))
    except (TypeError, AttributeError):
        in_spec = pl.BlockSpec((1, H), row_index_map)

    return pl.pallas_call(
        _copy_row_kernel,
        out_shape=jax.ShapeDtypeStruct((S, H), table.dtype),
        grid_spec=pltpu.PrefetchScalarGridSpec(
            num_scalar_prefetch=1,
            grid=(S,),
            in_specs=[in_spec],
            out_specs=pl.BlockSpec((1, H), lambda s, ids_ref: (s, 0)),
        ),
        compiler_params=pltpu.CompilerParams(
            dimension_semantics=("parallel",),
        ),
    )(ids, table)


# ---------------------------------------------------------------------------
# Dispatcher + EncoderRNN-equivalent entry points.
# ---------------------------------------------------------------------------
# Table-resident staging budget: kept well under v7x's 64 MiB physical /
# 32 MiB default-scoped VMEM (the table is double-buffered by the pipeline).
_TABLE_VMEM_BUDGET_BYTES = 4 << 20


def embed_tokens(tokens, embedding_weight,
                 table_vmem_budget_bytes=_TABLE_VMEM_BUDGET_BYTES):
    """Gather embedding rows for a 1-D int token array.

    tokens: (S,) int token ids;  embedding_weight: (V, H).
    Returns (S, H) rows in the table's dtype.
    """
    V, H = embedding_weight.shape
    ids = jnp.asarray(tokens, jnp.int32)          # input.type(torch.long)
    itemsize = jnp.dtype(embedding_weight.dtype).itemsize
    if V * H * itemsize <= table_vmem_budget_bytes:
        ts = max(8, 32 // itemsize)               # 8 for f32, 16 for bf16
        return _embed_rows_table_resident(ids, embedding_weight, ts)
    return _embed_rows_hbm_gather(ids, embedding_weight)


def encoder_rnn_forward(token, hidden, embedding_weight):
    """Single-token EncoderRNN.forward.

    Per the perf review this path does NOT launch a Pallas kernel: moving one
    H-sized row through a pallas_call is pure fixed overhead, so a plain XLA
    dynamic-slice is used.  Semantics match PyTorch exactly.
    """
    H = embedding_weight.shape[1]
    idx = jnp.asarray(token, jnp.int32)            # input.type(torch.long)
    row = jnp.take(embedding_weight, idx, axis=0)  # embedding lookup
    return row.reshape(1, 1, H), hidden            # .view(1, 1, -1); hidden unchanged
    # TODO(synk): self.gru is constructed in __init__ but never invoked in
    # forward, so no GRU step is implemented here (matches PyTorch semantics).


def encoder_rnn_forward_sequence(tokens, hidden, embedding_weight):
    """Batched encode-loop variant: embeds a whole token sequence in one
    pallas_call (amortized step overhead, dense (TS, H) output tiles).
    Returns (output, hidden) with output (S, 1, 1, H): the per-token
    EncoderRNN.forward outputs stacked along axis 0."""
    H = embedding_weight.shape[1]
    rows = embed_tokens(tokens, embedding_weight)  # (S, H)
    return rows.reshape(-1, 1, 1, H), hidden


if __name__ == "__main__":
    input_size = 16     # vocab size (small for the test)
    hidden_size = 256   # matches the module; multiple of 128 (lane dense)
    seq_len = 8
    ragged_len = 13     # exercises the pad-to-TS path

    key = jax.random.PRNGKey(0)
    k_emb, k_tok, k_seq, k_rag = jax.random.split(key, 4)

    # nn.Embedding(input_size, hidden_size) weights (deterministic synthetic).
    embedding_weight = jax.random.normal(
        k_emb, (input_size, hidden_size), dtype=jnp.float32)

    token = jax.random.randint(k_tok, (), 0, input_size)
    tokens = jax.random.randint(k_seq, (seq_len,), 0, input_size)
    ragged_tokens = jax.random.randint(k_rag, (ragged_len,), 0, input_size)
    hidden = jnp.zeros((1, 1, hidden_size), dtype=jnp.float32)  # initHidden()

    # --- single-token forward (exact PyTorch semantics; no Pallas launch) ---
    output, hidden_out = encoder_rnn_forward(token, hidden, embedding_weight)
    jax.block_until_ready((output, hidden_out))
    ref = embedding_weight[jnp.asarray(token, jnp.int32)].reshape(1, 1, -1)
    assert output.shape == (1, 1, hidden_size)
    assert hidden_out.shape == (1, 1, hidden_size)
    assert jnp.allclose(output, ref), "single-token embedding mismatch"
    assert jnp.allclose(hidden_out, hidden), "hidden pass-through mismatch"

    # --- batched-sequence forward: VMEM-resident-table Pallas kernel ---
    out_seq, hidden_out2 = encoder_rnn_forward_sequence(
        tokens, hidden, embedding_weight)
    jax.block_until_ready((out_seq, hidden_out2))
    ref_seq = embedding_weight[jnp.asarray(tokens, jnp.int32)].reshape(
        seq_len, 1, 1, hidden_size)
    assert out_seq.shape == (seq_len, 1, 1, hidden_size)
    assert jnp.allclose(out_seq, ref_seq), "table-resident gather mismatch"
    assert jnp.allclose(hidden_out2, hidden), "hidden pass-through mismatch (batched)"

    # --- ragged length (S not a multiple of TS) through the same kernel ---
    out_rag = embed_tokens(ragged_tokens, embedding_weight)
    jax.block_until_ready(out_rag)
    ref_rag = embedding_weight[jnp.asarray(ragged_tokens, jnp.int32)]
    assert out_rag.shape == (ragged_len, hidden_size)
    assert jnp.allclose(out_rag, ref_rag), "ragged table-resident gather mismatch"

    # --- large-vocab fallback (forced): per-row HBM gather path ---
    out_gather = embed_tokens(tokens, embedding_weight,
                              table_vmem_budget_bytes=0)
    jax.block_until_ready(out_gather)
    assert jnp.allclose(out_gather, ref_seq.reshape(seq_len, hidden_size)), \
        "HBM row-gather mismatch"

    print("KERNEL_OK")
</pallas_src>

<mosaic_0001>
module attributes {stable_mosaic.version = 11 : i64} {
  func.func @kernel(%arg0: i32, %arg1: memref<8xi32, #tpu.memory_space<smem>>, %arg2: memref<16x256xf32, #tpu.memory_space<vmem>>, %arg3: memref<8x256xf32, #tpu.memory_space<vmem>>) attributes {dimension_semantics = [#tpu.dimension_semantics<parallel>], iteration_bounds = array<i64: 1>, scalar_prefetch = 1 : i64, scratch_operands = 0 : i64, tpu.core_type = #tpu.core_type<tc>, window_params = [{pipeline_mode = #tpu.pipeline_mode<synchronous>, transform_indices = @transform_0, window_bounds = array<i64: 16, 256>}, {transform_indices = @transform_1, window_bounds = array<i64: 8, 256>}]} {
    %c8_i32 = arith.constant 8 : i32
    %0 = arith.muli %arg0, %c8_i32 : i32
    %c0_i32 = arith.constant 0 : i32
    %1 = arith.addi %0, %c0_i32 : i32
    %2 = arith.index_cast %1 : i32 to index
    %3 = memref.load %arg1[%2] : memref<8xi32, #tpu.memory_space<smem>>
    %c0_i32_0 = arith.constant 0 : i32
    %4 = arith.maxsi %3, %c0_i32_0 : i32
    %c15_i32 = arith.constant 15 : i32
    %5 = arith.minsi %4, %c15_i32 : i32
    %6 = arith.index_cast %5 : i32 to index
    %c0 = arith.constant 0 : index
    %7 = vector.load %arg2[%6, %c0] : memref<16x256xf32, #tpu.memory_space<vmem>>, vector<1x256xf32>
    %c0_1 = arith.constant 0 : index
    %c0_2 = arith.constant 0 : index
    %8 = vector.load %arg3[%c0_1, %c0_2] : memref<8x256xf32, #tpu.memory_space<vmem>>, vector<1x256xf32>
    tpu.vector_store %arg3[%c0_1, %c0_2], %7 {strides = array<i32>} : memref<8x256xf32, #tpu.memory_space<vmem>>, vector<1x256xf32>,
    %c1_i32 = arith.constant 1 : i32
    %9 = arith.addi %0, %c1_i32 : i32
    %10 = arith.index_cast %9 : i32 to index
    %11 = memref.load %arg1[%10] : memref<8xi32, #tpu.memory_space<smem>>
    %c0_i32_3 = arith.constant 0 : i32
    %12 = arith.maxsi %11, %c0_i32_3 : i32
    %c15_i32_4 = arith.constant 15 : i32
    %13 = arith.minsi %12, %c15_i32_4 : i32
    %14 = arith.index_cast %13 : i32 to index
    %c0_5 = arith.constant 0 : index
    %15 = vector.load %arg2[%14, %c0_5] : memref<16x256xf32, #tpu.memory_space<vmem>>, vector<1x256xf32>
    %c1 = arith.constant 1 : index
    %c0_6 = arith.constant 0 : index
    %16 = vector.load %arg3[%c1, %c0_6] : memref<8x256xf32, #tpu.memory_space<vmem>>, vector<1x256xf32>
    tpu.vector_store %arg3[%c1, %c0_6], %15 {strides = array<i32>} : memref<8x256xf32, #tpu.memory_space<vmem>>, vector<1x256xf32>,
    %c2_i32 = arith.constant 2 : i32
    %17 = arith.addi %0, %c2_i32 : i32
    %18 = arith.index_cast %17 : i32 to index
    %19 = memref.load %arg1[%18] : memref<8xi32, #tpu.memory_space<smem>>
    %c0_i32_7 = arith.constant 0 : i32
    %20 = arith.maxsi %19, %c0_i32_7 : i32
    %c15_i32_8 = arith.constant 15 : i32
    %21 = arith.minsi %20, %c15_i32_8 : i32
    %22 = arith.index_cast %21 : i32 to index
    %c0_9 = arith.constant 0 : index
    %23 = vector.load %arg2[%22, %c0_9] : memref<16x256xf32, #tpu.memory_space<vmem>>, vector<1x256xf32>
    %c2 = arith.constant 2 : index
    %c0_10 = arith.constant 0 : index
    %24 = vector.load %arg3[%c2, %c0_10] : memref<8x256xf32, #tpu.memory_space<vmem>>, vector<1x256xf32>
    tpu.vector_store %arg3[%c2, %c0_10], %23 {strides = array<i32>} : memref<8x256xf32, #tpu.memory_space<vmem>>, vector<1x256xf32>,
    %c3_i32 = arith.constant 3 : i32
    %25 = arith.addi %0, %c3_i32 : i32
    %26 = arith.index_cast %25 : i32 to index
    %27 = memref.load %arg1[%26] : memref<8xi32, #tpu.memory_space<smem>>
    %c0_i32_11 = arith.constant 0 : i32
    %28 = arith.maxsi %27, %c0_i32_11 : i32
    %c15_i32_12 = arith.constant 15 : i32
    %29 = arith.minsi %28, %c15_i32_12 : i32
    %30 = arith.index_cast %29 : i32 to index
    %c0_13 = arith.constant 0 : index
    %31 = vector.load %arg2[%30, %c0_13] : memref<16x256xf32, #tpu.memory_space<vmem>>, vector<1x256xf32>
    %c3 = arith.constant 3 : index
    %c0_14 = arith.constant 0 : index
    %32 = vector.load %arg3[%c3, %c0_14] : memref<8x256xf32, #tpu.memory_space<vmem>>, vector<1x256xf32>
    tpu.vector_store %arg3[%c3, %c0_14], %31 {strides = array<i32>} : memref<8x256xf32, #tpu.memory_space<vmem>>, vector<1x256xf32>,
    %c4_i32 = arith.constant 4 : i32
    %33 = arith.addi %0, %c4_i32 : i32
    %34 = arith.index_cast %33 : i32 to index
    %35 = memref.load %arg1[%34] : memref<8xi32, #tpu.memory_space<smem>>
    %c0_i32_15 = arith.constant 0 : i32
    %36 = arith.maxsi %35, %c0_i32_15 : i32
    %c15_i32_16 = arith.constant 15 : i32
    %37 = arith.minsi %36, %c15_i32_16 : i32
    %38 = arith.index_cast %37 : i32 to index
    %c0_17 = arith.constant 0 : index
    %39 = vector.load %arg2[%38, %c0_17] : memref<16x256xf32, #tpu.memory_space<vmem>>, vector<1x256xf32>
    %c4 = arith.constant 4 : index
    %c0_18 = arith.constant 0 : index
    %40 = vector.load %arg3[%c4, %c0_18] : memref<8x256xf32, #tpu.memory_space<vmem>>, vector<1x256xf32>
    tpu.vector_store %arg3[%c4, %c0_18], %39 {strides = array<i32>} : memref<8x256xf32, #tpu.memory_space<vmem>>, vector<1x256xf32>,
    %c5_i32 = arith.constant 5 : i32
    %41 = arith.addi %0, %c5_i32 : i32
    %42 = arith.index_cast %41 : i32 to index
    %43 = memref.load %arg1[%42] : memref<8xi32, #tpu.memory_space<smem>>
    %c0_i32_19 = arith.constant 0 : i32
    %44 = arith.maxsi %43, %c0_i32_19 : i32
    %c15_i32_20 = arith.constant 15 : i32
    %45 = arith.minsi %44, %c15_i32_20 : i32
    %46 = arith.index_cast %45 : i32 to index
    %c0_21 = arith.constant 0 : index
    %47 = vector.load %arg2[%46, %c0_21] : memref<16x256xf32, #tpu.memory_space<vmem>>, vector<1x256xf32>
    %c5 = arith.constant 5 : index
    %c0_22 = arith.constant 0 : index
    %48 = vector.load %arg3[%c5, %c0_22] : memref<8x256xf32, #tpu.memory_space<vmem>>, vector<1x256xf32>
    tpu.vector_store %arg3[%c5, %c0_22], %47 {strides = array<i32>} : memref<8x256xf32, #tpu.memory_space<vmem>>, vector<1x256xf32>,
    %c6_i32 = arith.constant 6 : i32
    %49 = arith.addi %0, %c6_i32 : i32
    %50 = arith.index_cast %49 : i32 to index
    %51 = memref.load %arg1[%50] : memref<8xi32, #tpu.memory_space<smem>>
    %c0_i32_23 = arith.constant 0 : i32
    %52 = arith.maxsi %51, %c0_i32_23 : i32
    %c15_i32_24 = arith.constant 15 : i32
    %53 = arith.minsi %52, %c15_i32_24 : i32
    %54 = arith.index_cast %53 : i32 to index
    %c0_25 = arith.constant 0 : index
    %55 = vector.load %arg2[%54, %c0_25] : memref<16x256xf32, #tpu.memory_space<vmem>>, vector<1x256xf32>
    %c6 = arith.constant 6 : index
    %c0_26 = arith.constant 0 : index
    %56 = vector.load %arg3[%c6, %c0_26] : memref<8x256xf32, #tpu.memory_space<vmem>>, vector<1x256xf32>
    tpu.vector_store %arg3[%c6, %c0_26], %55 {strides = array<i32>} : memref<8x256xf32, #tpu.memory_space<vmem>>, vector<1x256xf32>,
    %c7_i32 = arith.constant 7 : i32
    %57 = arith.addi %0, %c7_i32 : i32
    %58 = arith.index_cast %57 : i32 to index
    %59 = memref.load %arg1[%58] : memref<8xi32, #tpu.memory_space<smem>>
    %c0_i32_27 = arith.constant 0 : i32
    %60 = arith.maxsi %59, %c0_i32_27 : i32
    %c15_i32_28 = arith.constant 15 : i32
    %61 = arith.minsi %60, %c15_i32_28 : i32
    %62 = arith.index_cast %61 : i32 to index
    %c0_29 = arith.constant 0 : index
    %63 = vector.load %arg2[%62, %c0_29] : memref<16x256xf32, #tpu.memory_space<vmem>>, vector<1x256xf32>
    %c7 = arith.constant 7 : index
    %c0_30 = arith.constant 0 : index
    %64 = vector.load %arg3[%c7, %c0_30] : memref<8x256xf32, #tpu.memory_space<vmem>>, vector<1x256xf32>
    tpu.vector_store %arg3[%c7, %c0_30], %63 {strides = array<i32>} : memref<8x256xf32, #tpu.memory_space<vmem>>, vector<1x256xf32>,
    return
  }
  func.func @transform_0(%arg0: i32, %arg1: memref<8xi32, #tpu.memory_space<smem>>) -> (i32, i32) {
    %c0_i32 = arith.constant 0 : i32
    %c0_i32_0 = arith.constant 0 : i32
    %c0_i32_1 = arith.constant 0 : i32
    return %c0_i32, %c0_i32_0 : i32, i32
  }
  func.func @transform_1(%arg0: i32, %arg1: memref<8xi32, #tpu.memory_space<smem>>) -> (i32, i32) {
    %c0_i32 = arith.constant 0 : i32
    %c0_i32_0 = arith.constant 0 : i32
    return %arg0, %c0_i32 : i32, i32
  }
}

</mosaic_0001>

<llo_original>
// kernel: tpu_custom_call.1
$region0: #{tpu_custom_call.1}
  #allocation0 [shape = 'u32[]', space=smem, size = 0x4, offset = 0x4, fixed_abs, tag = 'smem constant byte address 0x4 - core index']
  #allocation1 [shape = 'u32[144,128]{1,0:T(1,128)}', space=vmem, size = 0x12000, scoped, tag = 'internal scratch']
  #allocation2 [shape = 's32[1]{0}', space=sflag, size = 0x4, scoped, tag = 'scoped memory for tpu_custom_call.1']
  #allocation3 [shape = 'u8[512]{0}', space=smem, size = 0x200, scoped, tag = 'prefetched SMEM operand 0']
  %s0 = inlined_call_operand.hbm [shape: s32[8], index: 0, kind: input, shape index: {}]
  %s1 = inlined_call_operand.hbm [shape: f32[16,256], index: 1, kind: input, shape index: {}]
  %s2 = inlined_call_operand.hbm [shape: f32[8,256], index: 2, kind: output, shape index: {}]
  %s3 = sld [smem:[#allocation0]]
  $region18: #{tpu_custom_call.1} parent=0
    _
  %s5 = ssub.s32 1, %s3
  %s6 = scalar_select 0, %s5, %s3
  %8 = dma.hbm_to_smem %s0, 16, [#allocation3], [#allocation2]
  %9 = dma.done [#allocation2], 16
  %10 = sfence
  $region1: #{tpu_custom_call.1} parent=0
    #allocation4 [shape = 'u8[16384]{0}', space=vmem, size = 0x4000, scoped, tag = 'input window, operand 1, single buffered']
    #allocation5 [shape = 's32[1]{0}', space=sflag, size = 0x4, scoped, tag = 'scoped memory for tpu_custom_call.1']
    #allocation6 [shape = 's32[1]{0}', space=sflag, size = 0x4, scoped, tag = 'scoped memory for tpu_custom_call.1']
    #allocation7 [shape = 'u8[8192]{0}', space=vmem, size = 0x2000, scoped, tag = 'output window, operand 0, single buffered']
    %11 = vsyncpa [#allocation5], 0
    %12 = vsyncpa [#allocation6], 0
    // Predicated region
    $region2: #{tpu_custom_call.1} parent=1 // pred_check
      _
    $region3: #{tpu_custom_call.1} parent=1 // pred_check_branch
      %14 = sbr.rel (0) target = $region5
    $region4: #{tpu_custom_call.1} parent=1 // pred_region
      %s16 = ssub.s32 512, 512
      %17 = vsyncadd [#allocation5], %s16
      %s18 = sshll.u32 [#allocation4], 4
      %s19 = int_to_ptr.vmem [resolvable:$true] %s18
      %24 = dma.hbm_to_vmem [thread:$0]  %s1, 512, %s19, [#allocation5], 256, 256, 16
    $region5: #{tpu_custom_call.1} parent=1 // pred_fallthru
      _
    // Predicated region
    $region6: #{tpu_custom_call.1} parent=1 // pred_check
      _
    $region7: #{tpu_custom_call.1} parent=1 // pred_check_branch
      %26 = sbr.rel (0) target = $region9
    $region8: #{tpu_custom_call.1} parent=1 // pred_region
      %27 = dma.done [#allocation5], 512
    $region9: #{tpu_custom_call.1} parent=1 // pred_fallthru
      _
    %s28 = smul.u32 0, 8
    %s29 = sld [smem:[#allocation3 + %s28]]
    %p30 = scmp.gt.s32.totalorder %s29, 0
    %s31 = scalar_select %p30, %s29, 0
    %p32 = scmp.lt.s32.totalorder %s31, 15
    %s33 = scalar_select %p32, %s31, 15
    %s34 = sshra.s32 %s33, 3
    %s35 = sand.u32 %s33, 7
    %s36 = sshra.s32 %s33, 3
    %s37 = sand.u32 %s33, 7
    %s38 = smul.u32 %s34, 2
    %s39 = smul.u32 %s38, 8
    %s40 = sadd.s32 %s39, %s37
    %s41 = scalar_lea.vmem [#allocation4], %s40
    %v42 = vld [vmem:[%s41] ss:$8 sm:$0x3]
    %v43 = vlaneseq
    %vm44 = vcmp.ge.s32.totalorder %v43, 0
    %vm45 = vcmp.lt.s32.totalorder %v43, 256
    %vm46 = vmand %vm44, %vm45
    %47 = vst.msk [vmem:[#allocation7] ss:$8 sm:$0x3] %vm46, %v42
    %48 = vst.msk [vmem:[#allocation7] ss:$8 sm:$0x0] %vm46, %v42
    %s49 = sadd.s32 %s28, 1
    %s50 = sld [smem:[#allocation3 + %s49]]
    %p51 = scmp.gt.s32.totalorder %s50, 0
    %s52 = scalar_select %p51, %s50, 0
    %p53 = scmp.lt.s32.totalorder %s52, 15
    %s54 = scalar_select %p53, %s52, 15
    %s55 = sshra.s32 %s54, 3
    %s56 = sand.u32 %s54, 7
    %s57 = sshra.s32 %s54, 3
    %s58 = sand.u32 %s54, 7
    %s59 = smul.u32 %s55, 2
    %s60 = smul.u32 %s59, 8
    %s61 = sadd.s32 %s60, %s58
    %s62 = scalar_lea.vmem [#allocation4], %s61
    %v63 = vld [vmem:[%s62] ss:$8 sm:$0x3]
    %s64 = scalar_lea.vmem [#allocation7], 1
    %65 = vst.msk [vmem:[%s64] ss:$8 sm:$0x3] %vm46, %v63
    %66 = vst.msk [vmem:[%s64] ss:$8 sm:$0x0] %vm46, %v63
    %s67 = sadd.s32 %s28, 2
    %s68 = sld [smem:[#allocation3 + %s67]]
    %p69 = scmp.gt.s32.totalorder %s68, 0
    %s70 = scalar_select %p69, %s68, 0
    %p71 = scmp.lt.s32.totalorder %s70, 15
    %s72 = scalar_select %p71, %s70, 15
    %s73 = sshra.s32 %s72, 3
    %s74 = sand.u32 %s72, 7
    %s75 = sshra.s32 %s72, 3
    %s76 = sand.u32 %s72, 7
    %s77 = smul.u32 %s73, 2
    %s78 = smul.u32 %s77, 8
    %s79 = sadd.s32 %s78, %s76
    %s80 = scalar_lea.vmem [#allocation4], %s79
    %v81 = vld [vmem:[%s80] ss:$8 sm:$0x3]
    %s82 = scalar_lea.vmem [#allocation7], 2
    %83 = vst.msk [vmem:[%s82] ss:$8 sm:$0x3] %vm46, %v81
    %84 = vst.msk [vmem:[%s82] ss:$8 sm:$0x0] %vm46, %v81
    %s85 = sadd.s32 %s28, 3
    %s86 = sld [smem:[#allocation3 + %s85]]
    %p87 = scmp.gt.s32.totalorder %s86, 0
    %s88 = scalar_select %p87, %s86, 0
    %p89 = scmp.lt.s32.totalorder %s88, 15
    %s90 = scalar_select %p89, %s88, 15
    %s91 = sshra.s32 %s90, 3
    %s92 = sand.u32 %s90, 7
    %s93 = sshra.s32 %s90, 3
    %s94 = sand.u32 %s90, 7
    %s95 = smul.u32 %s91, 2
    %s96 = smul.u32 %s95, 8
    %s97 = sadd.s32 %s96, %s94
    %s98 = scalar_lea.vmem [#allocation4], %s97
    %v99 = vld [vmem:[%s98] ss:$8 sm:$0x3]
    %s100 = scalar_lea.vmem [#allocation7], 3
    %101 = vst.msk [vmem:[%s100] ss:$8 sm:$0x3] %vm46, %v99
    %102 = vst.msk [vmem:[%s100] ss:$8 sm:$0x0] %vm46, %v99
    %s103 = sadd.s32 %s28, 4
    %s104 = sld [smem:[#allocation3 + %s103]]
    %p105 = scmp.gt.s32.totalorder %s104, 0
    %s106 = scalar_select %p105, %s104, 0
    %p107 = scmp.lt.s32.totalorder %s106, 15
    %s108 = scalar_select %p107, %s106, 15
    %s109 = sshra.s32 %s108, 3
    %s110 = sand.u32 %s108, 7
    %s111 = sshra.s32 %s108, 3
    %s112 = sand.u32 %s108, 7
    %s113 = smul.u32 %s109, 2
    %s114 = smul.u32 %s113, 8
    %s115 = sadd.s32 %s114, %s112
    %s116 = scalar_lea.vmem [#allocation4], %s115
    %v117 = vld [vmem:[%s116] ss:$8 sm:$0x3]
    %s118 = scalar_lea.vmem [#allocation7], 4
    %119 = vst.msk [vmem:[%s118] ss:$8 sm:$0x3] %vm46, %v117
    %120 = vst.msk [vmem:[%s118] ss:$8 sm:$0x0] %vm46, %v117
    %s121 = sadd.s32 %s28, 5
    %s122 = sld [smem:[#allocation3 + %s121]]
    %p123 = scmp.gt.s32.totalorder %s122, 0
    %s124 = scalar_select %p123, %s122, 0
    %p125 = scmp.lt.s32.totalorder %s124, 15
    %s126 = scalar_select %p125, %s124, 15
    %s127 = sshra.s32 %s126, 3
    %s128 = sand.u32 %s126, 7
    %s129 = sshra.s32 %s126, 3
    %s130 = sand.u32 %s126, 7
    %s131 = smul.u32 %s127, 2
    %s132 = smul.u32 %s131, 8
    %s133 = sadd.s32 %s132, %s130
    %s134 = scalar_lea.vmem [#allocation4], %s133
    %v135 = vld [vmem:[%s134] ss:$8 sm:$0x3]
    %s136 = scalar_lea.vmem [#allocation7], 5
    %137 = vst.msk [vmem:[%s136] ss:$8 sm:$0x3] %vm46, %v135
    %138 = vst.msk [vmem:[%s136] ss:$8 sm:$0x0] %vm46, %v135
    %s139 = sadd.s32 %s28, 6
    %s140 = sld [smem:[#allocation3 + %s139]]
    %p141 = scmp.gt.s32.totalorder %s140, 0
    %s142 = scalar_select %p141, %s140, 0
    %p143 = scmp.lt.s32.totalorder %s142, 15
    %s144 = scalar_select %p143, %s142, 15
    %s145 = sshra.s32 %s144, 3
    %s146 = sand.u32 %s144, 7
    %s147 = sshra.s32 %s144, 3
    %s148 = sand.u32 %s144, 7
    %s149 = smul.u32 %s145, 2
    %s150 = smul.u32 %s149, 8
    %s151 = sadd.s32 %s150, %s148
    %s152 = scalar_lea.vmem [#allocation4], %s151
    %v153 = vld [vmem:[%s152] ss:$8 sm:$0x3]
    %s154 = scalar_lea.vmem [#allocation7], 6
    %155 = vst.msk [vmem:[%s154] ss:$8 sm:$0x3] %vm46, %v153
    %156 = vst.msk [vmem:[%s154] ss:$8 sm:$0x0] %vm46, %v153
    %s157 = sadd.s32 %s28, 7
    %s158 = sld [smem:[#allocation3 + %s157]]
    %p159 = scmp.gt.s32.totalorder %s158, 0
    %s160 = scalar_select %p159, %s158, 0
    %p161 = scmp.lt.s32.totalorder %s160, 15
    %s162 = scalar_select %p161, %s160, 15
    %s163 = sshra.s32 %s162, 3
    %s164 = sand.u32 %s162, 7
    %s165 = sshra.s32 %s162, 3
    %s166 = sand.u32 %s162, 7
    %s167 = smul.u32 %s163, 2
    %s168 = smul.u32 %s167, 8
    %s169 = sadd.s32 %s168, %s166
    %s170 = scalar_lea.vmem [#allocation4], %s169
    %v171 = vld [vmem:[%s170] ss:$8 sm:$0x3]
    %s172 = scalar_lea.vmem [#allocation7], 7
    %173 = vst.msk [vmem:[%s172] ss:$8 sm:$0x3] %vm46, %v171
    %174 = vst.msk [vmem:[%s172] ss:$8 sm:$0x0] %vm46, %v171
    // Predicated region
    $region10: #{tpu_custom_call.1} parent=1 // pred_check
      _
    $region11: #{tpu_custom_call.1} parent=1 // pred_check_branch
      %176 = sbr.rel (0) target = $region13
    $region12: #{tpu_custom_call.1} parent=1 // pred_region
      %s178 = ssub.s32 256, 256
      %179 = vsyncadd [#allocation6], %s178
      %s181 = sshll.u32 [#allocation7], 4
      %s182 = int_to_ptr.vmem [resolvable:$true] %s181
      %184 = dma.vmem_to_hbm [thread:$0]  %s182, 256, %s2, [#allocation6]
    $region13: #{tpu_custom_call.1} parent=1 // pred_fallthru
      _
    // Predicated region
    $region14: #{tpu_custom_call.1} parent=1 // pred_check
      _
    $region15: #{tpu_custom_call.1} parent=1 // pred_check_branch
      %186 = sbr.rel (0) target = $region17
    $region16: #{tpu_custom_call.1} parent=1 // pred_region
      %187 = dma.done [#allocation6], 256
    $region17: #{tpu_custom_call.1} parent=1 // pred_fallthru
      _
    %188 = vsyncpa [#allocation5], 1
    %189 = vsyncpa [#allocation6], 1

</llo_original>
